<compile_context>
chip_gen: v7x
topology: tpu7x:2x2x1
jax: 0.10.0
libtpu: 0.0.40
codegen_flags: <defaults>
</compile_context>

<pallas_src>
import jax
import jax.numpy as jnp
from jax.experimental import pallas as pl
from jax.experimental.pallas import tpu as pltpu


def _make_zone_update_kernel(n_q):
    """Kernel factory: sum n_q heat-flux tiles, scale by SMEM scalar."""

    def kernel(scale_ref, *refs):
        q_refs = refs[:n_q]
        out_ref = refs[n_q]
        scale = scale_ref[0]                      # precomputed softplus(C_inv)/c_zone
        acc = q_refs[0][...].astype(jnp.float32)
        for r in q_refs[1:]:
            acc = acc + r[...].astype(jnp.float32)
        out_ref[...] = (acc * scale).astype(out_ref.dtype)

    return kernel


_LANE_CANDIDATES = (512, 256, 128)          # lane-dense last-dim candidates
_VMEM_PIPELINE_BUDGET = 40 << 20            # bytes for all double-buffered streams
_VMEM_LIMIT_BYTES = 48 << 20                # explicit scoped-VMEM limit (fits v7x 64 MiB)


def zone_update(q_env_total, q_int, q_hvac, q_solar_direct=None, *,
                c_inv_param, c_zone, max_tile_rows=None):
    """Pallas implementation of ZoneUpdate.forward.

    q_*         : arrays of identical shape (any rank), f32 or bf16.
    c_inv_param : scalar (the raw nn.Parameter C_inv).
    c_zone      : scalar float (envelop['c_zone']).
    max_tile_rows : optional cap on the row-tile size (testing / tuning knob).
    """
    qs = [q_env_total, q_int, q_hvac]
    if q_solar_direct is not None:
        qs.append(q_solar_direct)
    n_q = len(qs)

    orig_shape = q_env_total.shape
    out_dtype = q_env_total.dtype

    total = 1
    for d in orig_shape:
        total *= int(d)

    # Lane-dense 2-D view: elementwise op => any contiguous reshape is valid.
    lane_w = None
    for w in _LANE_CANDIDATES:
        if total % w == 0:
            lane_w = w
            break
    if lane_w is None:
        lane_w = int(orig_shape[-1])
    rows = total // lane_w

    qs2 = [q.reshape(rows, lane_w) for q in qs]

    # Hoisted scalar: softplus(C_inv) * (1 / c_zone), computed once in f32.
    scale = (jax.nn.softplus(jnp.asarray(c_inv_param, dtype=jnp.float32))
             * jnp.float32(1.0 / c_zone)).reshape(1)

    # Tile rows so all double-buffered streams fit the VMEM budget.
    n_streams = n_q + 1                                   # inputs + output
    per_tile_budget = _VMEM_PIPELINE_BUDGET // (2 * n_streams)
    tile_r = max(1, per_tile_budget // (lane_w * 4))      # conservative f32 sizing
    if max_tile_rows is not None:
        tile_r = min(tile_r, int(max_tile_rows))
    if tile_r >= rows:
        tile_r = rows                                     # single block == full dims
    else:
        tile_r = max(8, (tile_r // 8) * 8)                # sublane-aligned tile
    grid = (pl.cdiv(rows, tile_r),)                       # ragged tail masked by Pallas

    q_spec = pl.BlockSpec((tile_r, lane_w), lambda i: (i, 0))
    in_specs = [pl.BlockSpec(memory_space=pltpu.MemorySpace.SMEM)] + [q_spec] * n_q
    out_spec = pl.BlockSpec((tile_r, lane_w), lambda i: (i, 0))

    out = pl.pallas_call(
        _make_zone_update_kernel(n_q),
        out_shape=jax.ShapeDtypeStruct((rows, lane_w), out_dtype),
        grid=grid,
        in_specs=in_specs,
        out_specs=out_spec,
        compiler_params=pltpu.CompilerParams(
            dimension_semantics=("parallel",),
            vmem_limit_bytes=_VMEM_LIMIT_BYTES),
    )(scale, *qs2)

    return out.reshape(orig_shape)


def zone_update_ref(q_env_total, q_int, q_hvac, q_solar_direct=None, *,
                    c_inv_param, c_zone):
    c_inv_bounded = jax.nn.softplus(jnp.asarray(c_inv_param, jnp.float32)) * (1.0 / c_zone)
    total = (q_env_total.astype(jnp.float32)
             + q_int.astype(jnp.float32)
             + q_hvac.astype(jnp.float32))
    if q_solar_direct is not None:
        total = total + q_solar_direct.astype(jnp.float32)
    return (total * c_inv_bounded).astype(q_env_total.dtype)


if __name__ == "__main__":
    key = jax.random.PRNGKey(0)
    k1, k2, k3, k4 = jax.random.split(key, 4)

    # Deterministic parameter init mirroring the module __init__ (c_init=10000.0).
    c_init = 10000.0
    c_inv_param = jnp.float32(1.0 / c_init)
    c_zone = 2.0e6  # envelop['c_zone'] (zone thermal capacitance)

    # --- Test 1: small [batch=2, seq=8, features=128], 4-input path (f32) ---
    shape = (2, 8, 128)
    q_env_total = jax.random.normal(k1, shape, dtype=jnp.float32)
    q_int = jax.random.normal(k2, shape, dtype=jnp.float32)
    q_hvac = jax.random.normal(k3, shape, dtype=jnp.float32)
    q_solar_direct = jax.random.normal(k4, shape, dtype=jnp.float32)

    out4 = zone_update(q_env_total, q_int, q_hvac, q_solar_direct,
                       c_inv_param=c_inv_param, c_zone=c_zone)
    jax.block_until_ready(out4)
    ref4 = zone_update_ref(q_env_total, q_int, q_hvac, q_solar_direct,
                           c_inv_param=c_inv_param, c_zone=c_zone)
    assert out4.shape == shape and out4.dtype == jnp.float32
    assert jnp.allclose(out4, ref4, rtol=1e-6, atol=1e-9), "4-input mismatch"

    # --- Test 2: 3-input path (no direct solar gain) ---
    out3 = zone_update(q_env_total, q_int, q_hvac,
                       c_inv_param=c_inv_param, c_zone=c_zone)
    jax.block_until_ready(out3)
    ref3 = zone_update_ref(q_env_total, q_int, q_hvac,
                           c_inv_param=c_inv_param, c_zone=c_zone)
    assert jnp.allclose(out3, ref3, rtol=1e-6, atol=1e-9), "3-input mismatch"

    # --- Test 3: ragged multi-block grid (rows not divisible by the tile) ---
    shape_r = (2, 100, 128)   # -> lane_w=512, rows=50; cap tile rows to 16 -> grid=4
    qa = jax.random.normal(k1, shape_r, dtype=jnp.float32)
    qb = jax.random.normal(k2, shape_r, dtype=jnp.float32)
    qc = jax.random.normal(k3, shape_r, dtype=jnp.float32)
    qd = jax.random.normal(k4, shape_r, dtype=jnp.float32)
    out_r = zone_update(qa, qb, qc, qd, c_inv_param=c_inv_param, c_zone=c_zone,
                        max_tile_rows=16)
    jax.block_until_ready(out_r)
    ref_r = zone_update_ref(qa, qb, qc, qd, c_inv_param=c_inv_param, c_zone=c_zone)
    assert jnp.allclose(out_r, ref_r, rtol=1e-6, atol=1e-9), "ragged-tile mismatch"

    # --- Test 4: native bf16 inputs (no wrapper-side f32 cast) ---
    qa16 = qa.astype(jnp.bfloat16)
    qb16 = qb.astype(jnp.bfloat16)
    qc16 = qc.astype(jnp.bfloat16)
    out16 = zone_update(qa16, qb16, qc16, c_inv_param=c_inv_param, c_zone=c_zone)
    jax.block_until_ready(out16)
    ref16 = zone_update_ref(qa16, qb16, qc16, c_inv_param=c_inv_param, c_zone=c_zone)
    assert out16.dtype == jnp.bfloat16
    assert jnp.allclose(out16.astype(jnp.float32), ref16.astype(jnp.float32),
                        rtol=2e-2, atol=1e-9), "bf16 mismatch"

    print("KERNEL_OK")
</pallas_src>

<mosaic_0001>
module attributes {stable_mosaic.version = 11 : i64} {
  func.func @kernel(%arg0: i32, %arg1: memref<1xf32, #tpu.memory_space<smem>>, %arg2: memref<4x512xf32, #tpu.memory_space<vmem>>, %arg3: memref<4x512xf32, #tpu.memory_space<vmem>>, %arg4: memref<4x512xf32, #tpu.memory_space<vmem>>, %arg5: memref<4x512xf32, #tpu.memory_space<vmem>>, %arg6: memref<4x512xf32, #tpu.memory_space<vmem>>) attributes {dimension_semantics = [#tpu.dimension_semantics<parallel>], iteration_bounds = array<i64: 1>, scalar_prefetch = 0 : i64, scratch_operands = 0 : i64, tpu.core_type = #tpu.core_type<tc>, window_params = [{transform_indices = @transform_0, window_bounds = array<i64: 1>}, {transform_indices = @transform_1, window_bounds = array<i64: 4, 512>}, {transform_indices = @transform_2, window_bounds = array<i64: 4, 512>}, {transform_indices = @transform_3, window_bounds = array<i64: 4, 512>}, {transform_indices = @transform_4, window_bounds = array<i64: 4, 512>}, {transform_indices = @transform_5, window_bounds = array<i64: 4, 512>}]} {
    %c0 = arith.constant 0 : index
    %0 = memref.load %arg1[%c0] : memref<1xf32, #tpu.memory_space<smem>>
    %c0_0 = arith.constant 0 : index
    %c0_1 = arith.constant 0 : index
    %1 = vector.load %arg2[%c0_0, %c0_1] : memref<4x512xf32, #tpu.memory_space<vmem>>, vector<4x512xf32>
    %c0_2 = arith.constant 0 : index
    %c0_3 = arith.constant 0 : index
    %2 = vector.load %arg3[%c0_2, %c0_3] : memref<4x512xf32, #tpu.memory_space<vmem>>, vector<4x512xf32>
    %3 = arith.addf %1, %2 : vector<4x512xf32>
    %c0_4 = arith.constant 0 : index
    %c0_5 = arith.constant 0 : index
    %4 = vector.load %arg4[%c0_4, %c0_5] : memref<4x512xf32, #tpu.memory_space<vmem>>, vector<4x512xf32>
    %5 = arith.addf %3, %4 : vector<4x512xf32>
    %c0_6 = arith.constant 0 : index
    %c0_7 = arith.constant 0 : index
    %6 = vector.load %arg5[%c0_6, %c0_7] : memref<4x512xf32, #tpu.memory_space<vmem>>, vector<4x512xf32>
    %7 = arith.addf %5, %6 : vector<4x512xf32>
    %8 = vector.broadcast %0 : f32 to vector<4x512xf32>
    %9 = arith.mulf %7, %8 : vector<4x512xf32>
    %c0_8 = arith.constant 0 : index
    %c0_9 = arith.constant 0 : index
    %10 = vector.load %arg6[%c0_8, %c0_9] : memref<4x512xf32, #tpu.memory_space<vmem>>, vector<4x512xf32>
    tpu.vector_store %arg6[%c0_8, %c0_9], %9 {strides = array<i32>} : memref<4x512xf32, #tpu.memory_space<vmem>>, vector<4x512xf32>,
    return
  }
  func.func @transform_0(%arg0: i32) -> i32 {
    %c0_i32 = arith.constant 0 : i32
    %c0_i32_0 = arith.constant 0 : i32
    return %c0_i32 : i32
  }
  func.func @transform_1(%arg0: i32) -> (i32, i32) {
    %c0_i32 = arith.constant 0 : i32
    %c0_i32_0 = arith.constant 0 : i32
    return %arg0, %c0_i32 : i32, i32
  }
  func.func @transform_2(%arg0: i32) -> (i32, i32) {
    %c0_i32 = arith.constant 0 : i32
    %c0_i32_0 = arith.constant 0 : i32
    return %arg0, %c0_i32 : i32, i32
  }
  func.func @transform_3(%arg0: i32) -> (i32, i32) {
    %c0_i32 = arith.constant 0 : i32
    %c0_i32_0 = arith.constant 0 : i32
    return %arg0, %c0_i32 : i32, i32
  }
  func.func @transform_4(%arg0: i32) -> (i32, i32) {
    %c0_i32 = arith.constant 0 : i32
    %c0_i32_0 = arith.constant 0 : i32
    return %arg0, %c0_i32 : i32, i32
  }
  func.func @transform_5(%arg0: i32) -> (i32, i32) {
    %c0_i32 = arith.constant 0 : i32
    %c0_i32_0 = arith.constant 0 : i32
    return %arg0, %c0_i32 : i32, i32
  }
}

</mosaic_0001>

<llo_original>
// kernel: tpu_custom_call.1
$region0: #{tpu_custom_call.1}
  #allocation0 [shape = 'u32[]', space=smem, size = 0x4, offset = 0x4, fixed_abs, tag = 'smem constant byte address 0x4 - core index']
  #allocation1 [shape = 'u32[144,128]{1,0:T(1,128)}', space=vmem, size = 0x12000, scoped, tag = 'internal scratch']
  #allocation2 [shape = 'f32[1]{0:T(128)S(6)}', space=smem, size = 0x200, scoped, tag = 'scoped memory for tpu_custom_call.1']
  %s0 = inlined_call_operand.<no memory space> [shape: f32[1], index: 0, kind: input, shape index: {}]
  %s1 = inlined_call_operand.hbm [shape: f32[4,512], index: 1, kind: input, shape index: {}]
  %s2 = inlined_call_operand.hbm [shape: f32[4,512], index: 2, kind: input, shape index: {}]
  %s3 = inlined_call_operand.hbm [shape: f32[4,512], index: 3, kind: input, shape index: {}]
  %s4 = inlined_call_operand.hbm [shape: f32[4,512], index: 4, kind: input, shape index: {}]
  %s5 = inlined_call_operand.hbm [shape: f32[4,512], index: 5, kind: output, shape index: {}]
  %s6 = sld [smem:[#allocation0]]
  $region46: #{tpu_custom_call.1} parent=0
    _
  %s8 = ssub.s32 1, %s6
  %s9 = scalar_select 0, %s8, %s6
  %10 = sst [smem:[#allocation2]] %s0
  $region1: #{tpu_custom_call.1} parent=0
    #allocation3 [shape = 'u8[8192]{0}', space=vmem, size = 0x2000, scoped, tag = 'input window, operand 1, single buffered']
    #allocation4 [shape = 's32[1]{0}', space=sflag, size = 0x4, scoped, tag = 'scoped memory for tpu_custom_call.1']
    #allocation5 [shape = 's32[1]{0}', space=sflag, size = 0x4, scoped, tag = 'scoped memory for tpu_custom_call.1']
    #allocation6 [shape = 'u8[8192]{0}', space=vmem, size = 0x2000, scoped, tag = 'input window, operand 2, single buffered']
    #allocation7 [shape = 's32[1]{0}', space=sflag, size = 0x4, scoped, tag = 'scoped memory for tpu_custom_call.1']
    #allocation8 [shape = 'u8[8192]{0}', space=vmem, size = 0x2000, scoped, tag = 'input window, operand 3, single buffered']
    #allocation9 [shape = 'u8[8192]{0}', space=vmem, size = 0x2000, scoped, tag = 'input window, operand 4, single buffered']
    #allocation10 [shape = 's32[1]{0}', space=sflag, size = 0x4, scoped, tag = 'scoped memory for tpu_custom_call.1']
    #allocation11 [shape = 'u8[8192]{0}', space=vmem, size = 0x2000, scoped, tag = 'output window, operand 0, single buffered']
    %11 = vsyncpa [#allocation4], 0
    %12 = vsyncpa [#allocation7], 0
    %13 = vsyncpa [#allocation10], 0
    %14 = vsyncpa [#allocation5], 0
    // Predicated region
    $region2: #{tpu_custom_call.1} parent=1 // pred_check
      _
    $region3: #{tpu_custom_call.1} parent=1 // pred_check_branch
      %16 = sbr.rel (0) target = $region5
    $region4: #{tpu_custom_call.1} parent=1 // pred_region
      _
    $region5: #{tpu_custom_call.1} parent=1 // pred_fallthru
      _
    // Predicated region
    $region6: #{tpu_custom_call.1} parent=1 // pred_check
      _
    $region7: #{tpu_custom_call.1} parent=1 // pred_check_branch
      %18 = sbr.rel (0) target = $region9
    $region8: #{tpu_custom_call.1} parent=1 // pred_region
      %s20 = ssub.s32 256, 256
      %21 = vsyncadd [#allocation4], %s20
      %s23 = sshll.u32 [#allocation3], 4
      %s24 = int_to_ptr.vmem [resolvable:$true] %s23
      %26 = dma.hbm_to_vmem [thread:$0]  %s1, 256, %s24, [#allocation4]
    $region9: #{tpu_custom_call.1} parent=1 // pred_fallthru
      _
    // Predicated region
    $region10: #{tpu_custom_call.1} parent=1 // pred_check
      _
    $region11: #{tpu_custom_call.1} parent=1 // pred_check_branch
      %28 = sbr.rel (0) target = $region13
    $region12: #{tpu_custom_call.1} parent=1 // pred_region
      %s30 = ssub.s32 256, 256
      %31 = vsyncadd [#allocation7], %s30
      %s33 = sshll.u32 [#allocation6], 4
      %s34 = int_to_ptr.vmem [resolvable:$true] %s33
      %36 = dma.hbm_to_vmem [thread:$0]  %s2, 256, %s34, [#allocation7]
    $region13: #{tpu_custom_call.1} parent=1 // pred_fallthru
      _
    // Predicated region
    $region14: #{tpu_custom_call.1} parent=1 // pred_check
      _
    $region15: #{tpu_custom_call.1} parent=1 // pred_check_branch
      %38 = sbr.rel (0) target = $region17
    $region16: #{tpu_custom_call.1} parent=1 // pred_region
      %s40 = ssub.s32 256, 256
      %41 = vsyncadd [#allocation7], %s40
      %s43 = sshll.u32 [#allocation8], 4
      %s44 = int_to_ptr.vmem [resolvable:$true] %s43
      %46 = dma.hbm_to_vmem [thread:$0]  %s3, 256, %s44, [#allocation7]
    $region17: #{tpu_custom_call.1} parent=1 // pred_fallthru
      _
    // Predicated region
    $region18: #{tpu_custom_call.1} parent=1 // pred_check
      _
    $region19: #{tpu_custom_call.1} parent=1 // pred_check_branch
      %48 = sbr.rel (0) target = $region21
    $region20: #{tpu_custom_call.1} parent=1 // pred_region
      %s50 = ssub.s32 256, 256
      %51 = vsyncadd [#allocation10], %s50
      %s53 = sshll.u32 [#allocation9], 4
      %s54 = int_to_ptr.vmem [resolvable:$true] %s53
      %56 = dma.hbm_to_vmem [thread:$0]  %s4, 256, %s54, [#allocation10]
    $region21: #{tpu_custom_call.1} parent=1 // pred_fallthru
      _
    // Predicated region
    $region22: #{tpu_custom_call.1} parent=1 // pred_check
      _
    $region23: #{tpu_custom_call.1} parent=1 // pred_check_branch
      %58 = sbr.rel (0) target = $region25
    $region24: #{tpu_custom_call.1} parent=1 // pred_region
      %59 = dma.done [#allocation4], 256
    $region25: #{tpu_custom_call.1} parent=1 // pred_fallthru
      _
    // Predicated region
    $region26: #{tpu_custom_call.1} parent=1 // pred_check
      _
    $region27: #{tpu_custom_call.1} parent=1 // pred_check_branch
      %61 = sbr.rel (0) target = $region29
    $region28: #{tpu_custom_call.1} parent=1 // pred_region
      %62 = dma.done [#allocation7], 256
    $region29: #{tpu_custom_call.1} parent=1 // pred_fallthru
      _
    // Predicated region
    $region30: #{tpu_custom_call.1} parent=1 // pred_check
      _
    $region31: #{tpu_custom_call.1} parent=1 // pred_check_branch
      %64 = sbr.rel (0) target = $region33
    $region32: #{tpu_custom_call.1} parent=1 // pred_region
      %65 = dma.done [#allocation7], 256
    $region33: #{tpu_custom_call.1} parent=1 // pred_fallthru
      _
    // Predicated region
    $region34: #{tpu_custom_call.1} parent=1 // pred_check
      _
    $region35: #{tpu_custom_call.1} parent=1 // pred_check_branch
      %67 = sbr.rel (0) target = $region37
    $region36: #{tpu_custom_call.1} parent=1 // pred_region
      %68 = dma.done [#allocation10], 256
    $region37: #{tpu_custom_call.1} parent=1 // pred_fallthru
      _
    %s69 = sld [smem:[#allocation2]]
    %v70 = vld [vmem:[#allocation3] sm:$0xff]
    %v71 = vld [vmem:[#allocation3 + $0x8] sm:$0xff]
    %v72 = vld [vmem:[#allocation6] sm:$0xff]
    %v73 = vld [vmem:[#allocation6 + $0x8] sm:$0xff]
    %v74 = vadd.f32 %v70, %v72
    %v75 = vadd.f32 %v71, %v73
    %v76 = vld [vmem:[#allocation8] sm:$0xff]
    %v77 = vld [vmem:[#allocation8 + $0x8] sm:$0xff]
    %v78 = vadd.f32 %v74, %v76
    %v79 = vadd.f32 %v75, %v77
    %v80 = vld [vmem:[#allocation9] sm:$0xff]
    %v81 = vld [vmem:[#allocation9 + $0x8] sm:$0xff]
    %v82 = vadd.f32 %v78, %v80
    %v83 = vadd.f32 %v79, %v81
    %v84 = vstv %s69
    %v85 = vmul.f32 %v82, %v84
    %v86 = vmul.f32 %v83, %v84
    %87 = vst [vmem:[#allocation11] sm:$0xff] %v85
    %88 = vst [vmem:[#allocation11 + $0x8] sm:$0xff] %v86
    // Predicated region
    $region38: #{tpu_custom_call.1} parent=1 // pred_check
      _
    $region39: #{tpu_custom_call.1} parent=1 // pred_check_branch
      %90 = sbr.rel (0) target = $region41
    $region40: #{tpu_custom_call.1} parent=1 // pred_region
      %s92 = ssub.s32 256, 256
      %93 = vsyncadd [#allocation5], %s92
      %s95 = sshll.u32 [#allocation11], 4
      %s96 = int_to_ptr.vmem [resolvable:$true] %s95
      %98 = dma.vmem_to_hbm [thread:$0]  %s96, 256, %s5, [#allocation5]
    $region41: #{tpu_custom_call.1} parent=1 // pred_fallthru
      _
    // Predicated region
    $region42: #{tpu_custom_call.1} parent=1 // pred_check
      _
    $region43: #{tpu_custom_call.1} parent=1 // pred_check_branch
      %100 = sbr.rel (0) target = $region45
    $region44: #{tpu_custom_call.1} parent=1 // pred_region
      %101 = dma.done [#allocation5], 256
    $region45: #{tpu_custom_call.1} parent=1 // pred_fallthru
      _
    %102 = vsyncpa [#allocation4], 1
    %103 = vsyncpa [#allocation7], 1
    %104 = vsyncpa [#allocation10], 1
    %105 = vsyncpa [#allocation5], 1

</llo_original>
